<compile_context>
chip_gen: v7x
topology: tpu7x:2x2x1
jax: 0.10.0
libtpu: 0.0.40
codegen_flags: <defaults>
</compile_context>

<pallas_src>
import functools
import math

import jax
import jax.numpy as jnp
from jax import lax
from jax.experimental import pallas as pl
from jax.experimental.pallas import tpu as pltpu


# --------------------------------------------------------------------------
# small helpers
# --------------------------------------------------------------------------
def _round_up(x, m):
    return (x + m - 1) // m * m


def _pick_tk(K):
    """K tile (multiple of 128) minimizing padding, preferring larger tiles."""
    best_tk, best_kp = 128, _round_up(K, 128)
    for c in (256, 384, 512, 640, 768):
        kp = _round_up(K, c)
        if kp <= best_kp:
            best_tk, best_kp = c, kp
    return best_tk, best_kp


def _pick_rows(rows, target=2048):
    """Row-block size (multiple of 8) ~target, with minimal padding."""
    nblk = max(1, -(-rows // target))
    tr = _round_up(-(-rows // nblk), 8)
    return tr, tr * nblk


def _apply_act(r, act):
    if act == 'relu':
        return jnp.maximum(r, 0.0)
    if act == 'leaky':
        return jnp.where(r >= 0.0, r, 0.2 * r)
    if act == 'tanh':
        return jnp.tanh(r)
    if act == 'sigmoid':
        return 1.0 / (1.0 + jnp.exp(-r))
    return r


# --------------------------------------------------------------------------
# Pallas kernels
# --------------------------------------------------------------------------
def _matmul_kernel(a_ref, b_ref, bias_ref, o_ref, acc_ref, *, act):
    k = pl.program_id(2)

    @pl.when(k == 0)
    def _():
        acc_ref[...] = jnp.zeros_like(acc_ref)

    acc_ref[...] += jnp.dot(a_ref[...], b_ref[...],
                            preferred_element_type=jnp.float32)

    @pl.when(k == pl.num_programs(2) - 1)
    def _():
        r = _apply_act(acc_ref[...] + bias_ref[...], act)
        o_ref[...] = r.astype(o_ref.dtype)


def _conv_fused_kernel(x_ref, w_ref, b_ref, o_ref, *, tap_offs, tm, act):
    # x_ref: (XR, Cin) whole padded image (rows = padded_h * padded_w), bf16.
    # w_ref: (ntaps, Cin, TN) bf16.  b_ref: (1, TN) f32.  o_ref: (TM, TN) bf16.
    m0 = pl.multiple_of(pl.program_id(0) * tm, 16)
    span = tm + tap_offs[-1]
    xs = x_ref[pl.ds(m0, span), :]                    # aligned dynamic slice
    acc = jnp.zeros(o_ref.shape, jnp.float32)
    for t, off in enumerate(tap_offs):                # static per-tap slices
        a = xs[off:off + tm, :]
        acc = acc + jnp.dot(a, w_ref[t], preferred_element_type=jnp.float32)
    r = _apply_act(acc + b_ref[...], act)
    o_ref[...] = r.astype(o_ref.dtype)


def _inorm_kernel(x_ref, o_ref, sum_ref, ssq_ref, *, act, inv_n):
    p = pl.program_id(0)
    r = pl.program_id(1)

    @pl.when(jnp.logical_and(p == 0, r == 0))
    def _():
        sum_ref[...] = jnp.zeros_like(sum_ref)
        ssq_ref[...] = jnp.zeros_like(ssq_ref)

    x = x_ref[...].astype(jnp.float32)

    @pl.when(p == 0)
    def _():
        sum_ref[...] += jnp.sum(x, axis=0, keepdims=True)
        ssq_ref[...] += jnp.sum(x * x, axis=0, keepdims=True)

    @pl.when(p == 1)
    def _():
        mean = sum_ref[...] * inv_n
        var = jnp.maximum(ssq_ref[...] * inv_n - mean * mean, 0.0)
        y = (x - mean) * lax.rsqrt(var + 1e-5)
        o_ref[...] = _apply_act(y, act).astype(o_ref.dtype)


def _inorm_add_relu_kernel(x_ref, res_ref, o_ref, sum_ref, ssq_ref, *, inv_n):
    p = pl.program_id(0)
    r = pl.program_id(1)

    @pl.when(jnp.logical_and(p == 0, r == 0))
    def _():
        sum_ref[...] = jnp.zeros_like(sum_ref)
        ssq_ref[...] = jnp.zeros_like(ssq_ref)

    x = x_ref[...].astype(jnp.float32)

    @pl.when(p == 0)
    def _():
        sum_ref[...] += jnp.sum(x, axis=0, keepdims=True)
        ssq_ref[...] += jnp.sum(x * x, axis=0, keepdims=True)

    @pl.when(p == 1)
    def _():
        mean = sum_ref[...] * inv_n
        var = jnp.maximum(ssq_ref[...] * inv_n - mean * mean, 0.0)
        y = (x - mean) * lax.rsqrt(var + 1e-5) + res_ref[...].astype(jnp.float32)
        o_ref[...] = jnp.maximum(y, 0.0).astype(o_ref.dtype)


def _add_act_kernel(a_ref, b_ref, o_ref, *, act):
    r = a_ref[...].astype(jnp.float32) + b_ref[...].astype(jnp.float32)
    o_ref[...] = _apply_act(r, act).astype(o_ref.dtype)


def _loss_kernel(a_ref, b_ref, o_ref, *, op):
    @pl.when(pl.program_id(0) == 0)
    def _():
        o_ref[...] = jnp.zeros_like(o_ref)

    d = a_ref[...].astype(jnp.float32) - b_ref[...].astype(jnp.float32)
    v = jnp.abs(d) if op == 'l1' else d * d
    o_ref[...] += jnp.sum(v, axis=0, keepdims=True)


# --------------------------------------------------------------------------
# Pallas wrappers
# --------------------------------------------------------------------------
@functools.partial(jax.jit, static_argnames=('act',))
def matmul_bias_act(a, b, bias, act='none'):
    """(M,K)@(K,N)+bias with fused activation; bf16 operands, f32 accumulate."""
    M, K = a.shape
    N = b.shape[1]
    TM = min(256, _round_up(M, 16))
    TK, Kp = _pick_tk(K)
    Np = _round_up(N, 128)
    TN = 256 if Np % 256 == 0 else 128
    Mp = _round_up(M, TM)
    a_p = jnp.pad(a.astype(jnp.bfloat16), ((0, Mp - M), (0, Kp - K)))
    b_p = jnp.pad(b.astype(jnp.bfloat16), ((0, Kp - K), (0, Np - N)))
    bias_p = jnp.pad(bias.astype(jnp.float32).reshape(1, -1), ((0, 0), (0, Np - N)))
    grid = (Mp // TM, Np // TN, Kp // TK)
    out = pl.pallas_call(
        functools.partial(_matmul_kernel, act=act),
        out_shape=jax.ShapeDtypeStruct((Mp, Np), jnp.bfloat16),
        grid_spec=pltpu.PrefetchScalarGridSpec(
            num_scalar_prefetch=0, grid=grid,
            in_specs=[pl.BlockSpec((TM, TK), lambda i, j, k: (i, k)),
                      pl.BlockSpec((TK, TN), lambda i, j, k: (k, j)),
                      pl.BlockSpec((1, TN), lambda i, j, k: (0, j))],
            out_specs=pl.BlockSpec((TM, TN), lambda i, j, k: (i, j)),
            scratch_shapes=[pltpu.VMEM((TM, TN), jnp.float32)]),
        compiler_params=pltpu.CompilerParams(
            dimension_semantics=("parallel", "parallel", "arbitrary")),
    )(a_p, b_p, bias_p)
    return out[:M, :N]


def _conv_fused(x2d, w, bias, act):
    """Stride-1 conv with in-VMEM patch extraction.  x2d: (Hp, Wp, Cin) padded."""
    Hp, Wp, Cin = x2d.shape
    KH, KW, _, Cout = w.shape
    Ho, Wo = Hp - KH + 1, Wp - KW + 1
    M = Ho * Wp                                   # full-width rows (garbage cols sliced later)
    TM = min(256, _round_up(M, 16))
    Mp = _round_up(M, TM)
    Np = _round_up(Cout, 128)
    if Mp == TM:                                  # keep >=2 parallel blocks (v7x megacore)
        TN = 128
    else:
        TN = 256 if Np % 256 == 0 else 128
    ntaps = KH * KW
    tap_offs = tuple(i * Wp + j for i in range(KH) for j in range(KW))
    XR = Mp + tap_offs[-1]
    x_flat = x2d.reshape(Hp * Wp, Cin)
    x_flat = jnp.pad(x_flat, ((0, XR - Hp * Wp), (0, 0)))
    wk = w.reshape(ntaps, Cin, Cout).astype(jnp.bfloat16)
    if Np != Cout:
        wk = jnp.pad(wk, ((0, 0), (0, 0), (0, Np - Cout)))
    bp = jnp.pad(bias.astype(jnp.float32).reshape(1, -1), ((0, 0), (0, Np - Cout)))
    out = pl.pallas_call(
        functools.partial(_conv_fused_kernel, tap_offs=tap_offs, tm=TM, act=act),
        out_shape=jax.ShapeDtypeStruct((Mp, Np), jnp.bfloat16),
        grid_spec=pltpu.PrefetchScalarGridSpec(
            num_scalar_prefetch=0, grid=(Mp // TM, Np // TN),
            in_specs=[pl.BlockSpec((XR, Cin), lambda m, n: (0, 0)),
                      pl.BlockSpec((ntaps, Cin, TN), lambda m, n: (0, 0, n)),
                      pl.BlockSpec((1, TN), lambda m, n: (0, n))],
            out_specs=pl.BlockSpec((TM, TN), lambda m, n: (m, n))),
        compiler_params=pltpu.CompilerParams(
            dimension_semantics=("parallel", "parallel")),
    )(x_flat, wk, bp)
    return out[:M].reshape(Ho, Wp, Np)[:, :Wo, :Cout]


def _im2col_nhwc(x, kh, kw, stride):
    N, H, W, C = x.shape
    Ho = (H - kh) // stride + 1
    Wo = (W - kw) // stride + 1
    cols = []
    for i in range(kh):
        for j in range(kw):
            cols.append(x[:, i:i + stride * (Ho - 1) + 1:stride,
                          j:j + stride * (Wo - 1) + 1:stride, :])
    p = jnp.concatenate(cols, axis=-1)             # K ordered (kh, kw, cin)
    return p.reshape(N * Ho * Wo, kh * kw * C), Ho, Wo


@functools.partial(jax.jit, static_argnames=('stride', 'padding', 'pad_mode', 'act'))
def conv2d(x, w, b, stride=1, padding=0, pad_mode='zero', act='none'):
    """x: (1, H, W, Cin) bf16;  w: (KH, KW, Cin, Cout) bf16;  b: (Cout,) f32."""
    if isinstance(padding, int):
        padding = ((padding, padding), (padding, padding))
    KH, KW, Cin, Cout = w.shape
    if max(padding[0] + padding[1]) > 0:
        mode = 'reflect' if pad_mode == 'reflect' else 'constant'
        x = jnp.pad(x, ((0, 0), padding[0], padding[1], (0, 0)), mode=mode)
    N, Hp, Wp, _ = x.shape
    if stride == 1 and Cin >= 32 and N == 1:
        return _conv_fused(x[0], w, b, act)[None]
    a, Ho, Wo = _im2col_nhwc(x, KH, KW, stride)
    wm = w.reshape(KH * KW * Cin, Cout)
    out = matmul_bias_act(a, wm, b, act=act)
    return out.reshape(N, Ho, Wo, Cout)


@jax.jit
def conv_transpose2d(x, sub, b):
    """ConvTranspose2d(k=3, s=2, p=1, op=1) via sub-pixel phase decomposition."""
    y_ee = conv2d(x, sub['ee'], b, stride=1, padding=((0, 0), (0, 0)))
    y_eo = conv2d(x, sub['eo'], b, stride=1, padding=((0, 0), (0, 1)))
    y_oe = conv2d(x, sub['oe'], b, stride=1, padding=((0, 1), (0, 0)))
    y_oo = conv2d(x, sub['oo'], b, stride=1, padding=((0, 1), (0, 1)))
    n, h, w_, c = y_ee.shape
    top = jnp.stack([y_ee, y_eo], axis=3)          # (n, h, w, 2, c)
    bot = jnp.stack([y_oe, y_oo], axis=3)
    out = jnp.stack([top, bot], axis=2)            # (n, h, 2, w, 2, c)
    return out.reshape(n, 2 * h, 2 * w_, c)


@functools.partial(jax.jit, static_argnames=('act',))
def instance_norm_act(x, act='none'):
    N, H, W, C = x.shape
    HW = H * W
    TR, Rp = _pick_rows(HW, target=4096)
    xr = jnp.pad(x.reshape(HW, C), ((0, Rp - HW), (0, 0)))
    out = pl.pallas_call(
        functools.partial(_inorm_kernel, act=act, inv_n=1.0 / HW),
        out_shape=jax.ShapeDtypeStruct((Rp, C), x.dtype),
        grid_spec=pltpu.PrefetchScalarGridSpec(
            num_scalar_prefetch=0, grid=(2, Rp // TR),
            in_specs=[pl.BlockSpec((TR, C), lambda p, r: (r, 0))],
            out_specs=pl.BlockSpec((TR, C), lambda p, r: (r, 0)),
            scratch_shapes=[pltpu.VMEM((1, C), jnp.float32),
                            pltpu.VMEM((1, C), jnp.float32)]),
        compiler_params=pltpu.CompilerParams(
            dimension_semantics=("arbitrary", "arbitrary")),
    )(xr)
    return out[:HW].reshape(N, H, W, C)


@jax.jit
def instance_norm_add_relu(x, res):
    N, H, W, C = x.shape
    HW = H * W
    TR, Rp = _pick_rows(HW, target=4096)
    xr = jnp.pad(x.reshape(HW, C), ((0, Rp - HW), (0, 0)))
    rr = jnp.pad(res.reshape(HW, C), ((0, Rp - HW), (0, 0)))
    out = pl.pallas_call(
        functools.partial(_inorm_add_relu_kernel, inv_n=1.0 / HW),
        out_shape=jax.ShapeDtypeStruct((Rp, C), x.dtype),
        grid_spec=pltpu.PrefetchScalarGridSpec(
            num_scalar_prefetch=0, grid=(2, Rp // TR),
            in_specs=[pl.BlockSpec((TR, C), lambda p, r: (r, 0)),
                      pl.BlockSpec((TR, C), lambda p, r: (r, 0))],
            out_specs=pl.BlockSpec((TR, C), lambda p, r: (r, 0)),
            scratch_shapes=[pltpu.VMEM((1, C), jnp.float32),
                            pltpu.VMEM((1, C), jnp.float32)]),
        compiler_params=pltpu.CompilerParams(
            dimension_semantics=("arbitrary", "arbitrary")),
    )(xr, rr)
    return out[:HW].reshape(N, H, W, C)


@functools.partial(jax.jit, static_argnames=('act',))
def add_act(a, b, act='none'):
    shape, L = a.shape, a.size
    C = 1024
    rows = -(-L // C)
    TR, Rp = _pick_rows(rows, target=512)
    total = Rp * C
    a_f = jnp.pad(a.reshape(-1), (0, total - L)).reshape(Rp, C)
    b_f = jnp.pad(b.reshape(-1), (0, total - L)).reshape(Rp, C)
    out = pl.pallas_call(
        functools.partial(_add_act_kernel, act=act),
        out_shape=jax.ShapeDtypeStruct((Rp, C), a.dtype),
        grid_spec=pltpu.PrefetchScalarGridSpec(
            num_scalar_prefetch=0, grid=(Rp // TR,),
            in_specs=[pl.BlockSpec((TR, C), lambda i: (i, 0)),
                      pl.BlockSpec((TR, C), lambda i: (i, 0))],
            out_specs=pl.BlockSpec((TR, C), lambda i: (i, 0))),
        compiler_params=pltpu.CompilerParams(dimension_semantics=("parallel",)),
    )(a_f, b_f)
    return out.reshape(-1)[:L].reshape(shape)


@functools.partial(jax.jit, static_argnames=('op',))
def mean_loss(a, b, op='l1'):
    """mean |a-b| (op='l1') or mean (a-b)^2 (op='mse'); reduction in Pallas."""
    L = a.size
    C = 512
    rows = -(-L // C)
    TR, Rp = _pick_rows(rows, target=1024)
    total = Rp * C
    a_f = jnp.pad(a.reshape(-1), (0, total - L)).reshape(Rp, C)
    b_f = jnp.pad(b.reshape(-1), (0, total - L)).reshape(Rp, C)
    partial = pl.pallas_call(
        functools.partial(_loss_kernel, op=op),
        out_shape=jax.ShapeDtypeStruct((1, C), jnp.float32),
        grid_spec=pltpu.PrefetchScalarGridSpec(
            num_scalar_prefetch=0, grid=(Rp // TR,),
            in_specs=[pl.BlockSpec((TR, C), lambda i: (i, 0)),
                      pl.BlockSpec((TR, C), lambda i: (i, 0))],
            out_specs=pl.BlockSpec((1, C), lambda i: (0, 0))),
        compiler_params=pltpu.CompilerParams(dimension_semantics=("arbitrary",)),
    )(a_f, b_f)
    return jnp.sum(partial) / L


# --------------------------------------------------------------------------
# Pooling glue (plain JAX; minor cost)
# --------------------------------------------------------------------------
@jax.jit
def avg_pool_3x3_s2_p1(x):
    # AvgPool2d(3, stride=2, padding=1, count_include_pad=False), NHWC
    pads = [(0, 0), (1, 1), (1, 1), (0, 0)]
    xf = x.astype(jnp.float32)
    s = lax.reduce_window(xf, 0.0, lax.add, (1, 3, 3, 1), (1, 2, 2, 1), pads)
    c = lax.reduce_window(jnp.ones_like(xf), 0.0, lax.add, (1, 3, 3, 1), (1, 2, 2, 1), pads)
    return (s / c).astype(x.dtype)


def max_pool_2x2(x):
    N, H, W, C = x.shape
    return x.reshape(N, H // 2, 2, W // 2, 2, C).max(axis=(2, 4))


@functools.partial(jax.jit, static_argnames=('oh', 'ow'))
def adaptive_avg_pool(x, oh=7, ow=7):
    N, H, W, C = x.shape
    rows = []
    for i in range(oh):
        hs, he = (i * H) // oh, -(-((i + 1) * H) // oh)
        cols = []
        for j in range(ow):
            ws, we = (j * W) // ow, -(-((j + 1) * W) // ow)
            cols.append(jnp.mean(x[:, hs:he, ws:we, :], axis=(1, 2)))
        rows.append(jnp.stack(cols, axis=1))
    return jnp.stack(rows, axis=1)                 # (N, oh, ow, C)


# --------------------------------------------------------------------------
# Deterministic parameter init (synthetic weights; no checkpoint load)
# --------------------------------------------------------------------------
class PRNG:
    def __init__(self, key):
        self.key = key

    def next(self):
        self.key, sub = jax.random.split(self.key)
        return sub


def conv_params(rng, cout, cin, kh, kw):
    s = 1.0 / math.sqrt(cin * kh * kw)
    w = jax.random.uniform(rng.next(), (kh, kw, cin, cout), jnp.float32, -s, s)
    b = jax.random.uniform(rng.next(), (cout,), jnp.float32, -s, s)
    return w.astype(jnp.bfloat16), b


def convT_params(rng, cin, cout, kh, kw):
    s = 1.0 / math.sqrt(cout * kh * kw)
    w_t = jax.random.uniform(rng.next(), (cin, cout, kh, kw), jnp.float32, -s, s)
    b = jax.random.uniform(rng.next(), (cout,), jnp.float32, -s, s)
    # effective forward-conv weight (HWIO, spatially flipped), split by output parity
    w_eff = jnp.transpose(w_t, (2, 3, 0, 1))[::-1, ::-1]
    sub = {'ee': w_eff[1:2, 1:2].astype(jnp.bfloat16),
           'eo': w_eff[1:2, ::2].astype(jnp.bfloat16),
           'oe': w_eff[::2, 1:2].astype(jnp.bfloat16),
           'oo': w_eff[::2, ::2].astype(jnp.bfloat16)}
    return sub, b


def init_global_generator(rng, input_nc, output_nc, ngf=64):
    P = {'m0': conv_params(rng, ngf, input_nc, 7, 7), 'down': [], 'res': [], 'up': []}
    for i in range(4):
        mult = 2 ** i
        P['down'].append(conv_params(rng, ngf * mult * 2, ngf * mult, 3, 3))
    dim = ngf * 16
    planes = dim // 4
    for _ in range(9):
        P['res'].append((conv_params(rng, planes, dim, 1, 1),
                         conv_params(rng, planes, planes, 3, 3),
                         conv_params(rng, dim, planes, 1, 1)))
    for i in range(4):
        mult = 2 ** (4 - i)
        P['up'].append(convT_params(rng, ngf * mult, ngf * mult // 2, 3, 3))
    P['final'] = conv_params(rng, output_nc, ngf, 7, 7)
    return P


def init_discriminator(rng, input_nc, ndf=64):
    P = {'c0': conv_params(rng, ndf, input_nc, 4, 4), 'convs': []}
    nf = ndf
    for _ in range(1, 3):
        nf_prev, nf = nf, min(nf * 2, 512)
        P['convs'].append(conv_params(rng, nf, nf_prev, 4, 4))
    nf_prev, nf = nf, min(nf * 2, 512)
    P['convs'].append(conv_params(rng, nf, nf_prev, 4, 4))
    P['c4'] = conv_params(rng, 1, nf, 4, 4)
    s = 1.0 / math.sqrt(49.0)
    P['lin_w'] = jax.random.uniform(rng.next(), (49, 1), jnp.float32, -s, s).astype(jnp.bfloat16)
    P['lin_b'] = jax.random.uniform(rng.next(), (1,), jnp.float32, -s, s)
    return P


VGG_CFG = [64, 64, 'M', 128, 128, 'M', 256, 256, 256, 256, 'M',
           512, 512, 512, 512, 'M', 512]   # = torchvision vgg19.features[:30]


def init_vgg(rng):
    # TODO(synk): real VGG19 uses ImageNet-pretrained weights; deterministic random init here.
    params, cin = [], 3
    for v in VGG_CFG:
        if v == 'M':
            continue
        params.append(conv_params(rng, v, cin, 3, 3))
        cin = v
    return params


def init_pix2pixhd(rng, input_nc):
    return {'input_nc': input_nc,
            'G': init_global_generator(rng, input_nc + 1, 3, ngf=64),
            'D1': init_discriminator(rng, input_nc + 3, ndf=64),
            'D2': init_discriminator(rng, input_nc + 3, ndf=64),
            'VGG': init_vgg(rng)}


# --------------------------------------------------------------------------
# Network forwards (NHWC, bf16 activations)
# --------------------------------------------------------------------------
def global_generator_forward(P, onehot, noise):
    x = jnp.concatenate([onehot, noise], axis=-1)
    results = [x]
    w, b = P['m0']
    h = conv2d(x, w, b, stride=1, padding=3, pad_mode='reflect')
    results.append(instance_norm_act(h, act='relu'))
    for i in range(4):
        w, b = P['down'][i]
        h = conv2d(results[-1], w, b, stride=2, padding=1)
        results.append(instance_norm_act(h, act='relu'))
    h = results[-1]
    for (c1, c2, c3) in P['res']:
        r = h
        t = instance_norm_act(conv2d(h, c1[0], c1[1]), act='relu')
        t = instance_norm_act(conv2d(t, c2[0], c2[1], stride=1, padding=1), act='relu')
        t = conv2d(t, c3[0], c3[1])
        h = instance_norm_add_relu(t, r)
    results.append(h)
    for i in range(4):
        sub, b = P['up'][i]
        inp = add_act(results[-1], results[5 - i], act='none')   # skip connection
        h = conv_transpose2d(inp, sub, b)
        results.append(instance_norm_act(h, act='relu'))
    w, b = P['final']
    return conv2d(results[-1], w, b, stride=1, padding=3, pad_mode='reflect', act='tanh')


def discriminator_forward(P, x):
    feats = []
    w, b = P['c0']
    h = conv2d(x, w, b, stride=2, padding=0, act='leaky')
    feats.append(h)
    for (w, b), s in zip(P['convs'], (2, 2, 1)):
        h = conv2d(h, w, b, stride=s, padding=0)
        h = instance_norm_act(h, act='leaky')
        feats.append(h)
    w, b = P['c4']
    h = conv2d(h, w, b, stride=1, padding=0)
    feats.append(h)
    pooled = adaptive_avg_pool(h, oh=7, ow=7)
    flat = pooled.reshape(pooled.shape[0], -1)                    # (N, 49)
    final = matmul_bias_act(flat, P['lin_w'], P['lin_b'], act='sigmoid')  # (N, 1)
    feats.append(final)
    return feats                                                  # 6 tensors


def multiscale_d_forward(P1, P2, x):
    return [discriminator_forward(P1, avg_pool_3x3_s2_p1(x)),
            discriminator_forward(P2, x)]


def gan_loss(pred, target_is_real):
    p = jnp.mean(jnp.stack([pred[0][-1], pred[1][-1]], axis=0), axis=0)
    target = jnp.full_like(p, 1.0 if target_is_real else 0.0)
    return mean_loss(p, target, op='mse')


def vgg19_features30(params, x):
    idx = 0
    for v in VGG_CFG:
        if v == 'M':
            x = max_pool_2x2(x)
        else:
            w, b = params[idx]
            idx += 1
            x = conv2d(x, w, b, stride=1, padding=1, act='relu')
    return x


def pix2pixhd_forward(params, label, real, noise, infer=False):
    input_nc = params['input_nc']
    onehot = jax.nn.one_hot(label[:, 0].astype(jnp.int32), input_nc,
                            axis=-1, dtype=jnp.bfloat16)            # (N, H, W, input_nc)
    noise_b = noise.astype(jnp.bfloat16)
    real_b = real.astype(jnp.bfloat16)
    fake = global_generator_forward(params['G'], onehot, noise_b)

    def discriminate(img):
        return multiscale_d_forward(params['D1'], params['D2'],
                                    jnp.concatenate([onehot, img], axis=-1))

    pred_fake_d = discriminate(fake)
    loss_D_fake = gan_loss(pred_fake_d, False)
    pred_real = discriminate(real_b)
    loss_D_real = gan_loss(pred_real, True)
    # PyTorch recomputes discriminate(fake) for the G loss; the forward pass is
    # identical, so reuse pred_fake_d instead of a second discriminator pass.
    pred_fake = pred_fake_d
    loss_G_fake = gan_loss(pred_fake, True)

    loss_G_feat = 0.0
    for i in range(2):
        for j in range(len(pred_fake[i]) - 1):
            loss_G_feat += 0.5 * mean_loss(pred_fake[i][j], pred_real[i][j], op='l1') * 10.0

    loss_G_VGG = mean_loss(vgg19_features30(params['VGG'], fake),
                           vgg19_features30(params['VGG'], real_b), op='l1') * 10.0

    losses = [loss_G_fake, loss_G_feat, loss_G_VGG, loss_D_real, loss_D_fake]
    return losses, (fake if infer else None)


# --------------------------------------------------------------------------
if __name__ == "__main__":
    key = jax.random.PRNGKey(0)
    k_label, k_real, k_noise, k_params = jax.random.split(key, 4)

    input_nc = 4
    # H=W=144 is the smallest spatial size admitted by the architecture:
    # divisible by 16 for the generator and large enough that the
    # discriminator conv stack (k=4, padding=0) keeps positive extents.
    H = W = 144
    label = jax.random.randint(k_label, (1, 1, H, W), 0, input_nc).astype(jnp.float32)
    real = jax.random.uniform(k_real, (1, H, W, 3), jnp.float32, -1.0, 1.0)
    # torch.randn noise generated inside GlobalGenerator.forward -> passed in
    # here as a deterministic input (NHWC).
    noise = jax.random.normal(k_noise, (1, H, W, 1), jnp.float32)

    params = init_pix2pixhd(PRNG(k_params), input_nc)
    losses, fake = pix2pixhd_forward(params, label, real, noise, infer=True)
    jax.block_until_ready(losses)
    jax.block_until_ready(fake)
    print("KERNEL_OK")
</pallas_src>

<mosaic_0001>
module attributes {stable_mosaic.version = 11 : i64} {
  func.func @_matmul_kernel(%arg0: i32, %arg1: i32, %arg2: i32, %arg3: memref<256x256xbf16, #tpu.memory_space<vmem>>, %arg4: memref<256x128xbf16, #tpu.memory_space<vmem>>, %arg5: memref<1x128xf32, #tpu.memory_space<vmem>>, %arg6: memref<256x128xbf16, #tpu.memory_space<vmem>>, %arg7: memref<256x128xf32, #tpu.memory_space<vmem>>) attributes {dimension_semantics = [#tpu.dimension_semantics<parallel>, #tpu.dimension_semantics<parallel>, #tpu.dimension_semantics<arbitrary>], iteration_bounds = array<i64: 81, 1, 1>, scalar_prefetch = 0 : i64, scratch_operands = 1 : i64, tpu.core_type = #tpu.core_type<tc>, window_params = [{transform_indices = @transform_0, window_bounds = array<i64: 256, 256>}, {transform_indices = @transform_1, window_bounds = array<i64: 256, 128>}, {transform_indices = @transform_2, window_bounds = array<i64: 1, 128>}, {transform_indices = @transform_3, window_bounds = array<i64: 256, 128>}]} {
    %c0_i32 = arith.constant 0 : i32
    %0 = arith.cmpi eq, %arg2, %c0_i32 : i32
    %1 = arith.extui %0 : i1 to i32
    %c0_i32_0 = arith.constant 0 : i32
    %2 = arith.cmpi ne, %1, %c0_i32_0 : i32
    scf.if %2 {
      %cst_10 = arith.constant 0.000000e+00 : f32
      %12 = vector.broadcast %cst_10 : f32 to vector<256x128xf32>
      %c0_11 = arith.constant 0 : index
      %c0_12 = arith.constant 0 : index
      %13 = vector.load %arg7[%c0_11, %c0_12] : memref<256x128xf32, #tpu.memory_space<vmem>>, vector<256x128xf32>
      tpu.vector_store %arg7[%c0_11, %c0_12], %12 {strides = array<i32>} : memref<256x128xf32, #tpu.memory_space<vmem>>, vector<256x128xf32>,
    } else {
    }
    %c0 = arith.constant 0 : index
    %c0_1 = arith.constant 0 : index
    %3 = vector.load %arg7[%c0, %c0_1] : memref<256x128xf32, #tpu.memory_space<vmem>>, vector<256x128xf32>
    %c0_2 = arith.constant 0 : index
    %c0_3 = arith.constant 0 : index
    %4 = vector.load %arg3[%c0_2, %c0_3] : memref<256x256xbf16, #tpu.memory_space<vmem>>, vector<256x256xbf16>
    %c0_4 = arith.constant 0 : index
    %c0_5 = arith.constant 0 : index
    %5 = vector.load %arg4[%c0_4, %c0_5] : memref<256x128xbf16, #tpu.memory_space<vmem>>, vector<256x128xbf16>
    %cst = arith.constant dense<0.000000e+00> : vector<256x128xf32>
    %6 = tpu.matmul %4, %5, %cst {dimension_numbers = #tpu.dot_dimension_numbers<[1], [0], [0], [1], [0, 0, 1, 1], [], []>} : vector<256x256xbf16>, vector<256x128xbf16>, vector<256x128xf32> -> vector<256x128xf32>
    %7 = arith.addf %3, %6 : vector<256x128xf32>
    %c0_6 = arith.constant 0 : index
    %c0_7 = arith.constant 0 : index
    %8 = vector.load %arg7[%c0_6, %c0_7] : memref<256x128xf32, #tpu.memory_space<vmem>>, vector<256x128xf32>
    tpu.vector_store %arg7[%c0_6, %c0_7], %7 {strides = array<i32>} : memref<256x128xf32, #tpu.memory_space<vmem>>, vector<256x128xf32>,
    %c0_i32_8 = arith.constant 0 : i32
    %9 = arith.cmpi eq, %arg2, %c0_i32_8 : i32
    %10 = arith.extui %9 : i1 to i32
    %c0_i32_9 = arith.constant 0 : i32
    %11 = arith.cmpi ne, %10, %c0_i32_9 : i32
    scf.if %11 {
      %c0_10 = arith.constant 0 : index
      %c0_11 = arith.constant 0 : index
      %12 = vector.load %arg7[%c0_10, %c0_11] : memref<256x128xf32, #tpu.memory_space<vmem>>, vector<256x128xf32>
      %c0_12 = arith.constant 0 : index
      %c0_13 = arith.constant 0 : index
      %13 = vector.load %arg5[%c0_12, %c0_13] : memref<1x128xf32, #tpu.memory_space<vmem>>, vector<1x128xf32>
      %14 = vector.broadcast %13 : vector<1x128xf32> to vector<256x128xf32>
      %15 = arith.addf %12, %14 : vector<256x128xf32>
      %16 = arith.truncf %15 : vector<256x128xf32> to vector<256x128xbf16>
      %c0_14 = arith.constant 0 : index
      %c0_15 = arith.constant 0 : index
      %17 = vector.load %arg6[%c0_14, %c0_15] : memref<256x128xbf16, #tpu.memory_space<vmem>>, vector<256x128xbf16>
      tpu.vector_store %arg6[%c0_14, %c0_15], %16 {strides = array<i32>} : memref<256x128xbf16, #tpu.memory_space<vmem>>, vector<256x128xbf16>,
    } else {
    }
    return
  }
  func.func @transform_0(%arg0: i32, %arg1: i32, %arg2: i32) -> (i32, i32) {
    %c0_i32 = arith.constant 0 : i32
    return %arg0, %arg2 : i32, i32
  }
  func.func @transform_1(%arg0: i32, %arg1: i32, %arg2: i32) -> (i32, i32) {
    %c0_i32 = arith.constant 0 : i32
    return %arg2, %arg1 : i32, i32
  }
  func.func @transform_2(%arg0: i32, %arg1: i32, %arg2: i32) -> (i32, i32) {
    %c0_i32 = arith.constant 0 : i32
    %c0_i32_0 = arith.constant 0 : i32
    return %c0_i32, %arg1 : i32, i32
  }
  func.func @transform_3(%arg0: i32, %arg1: i32, %arg2: i32) -> (i32, i32) {
    %c0_i32 = arith.constant 0 : i32
    return %arg0, %arg1 : i32, i32
  }
}

</mosaic_0001>

<llo_original>
// kernel: matmul_bias_act.1
$region0: #{matmul_bias_act.1}
  #allocation0 [shape = 'u32[]', space=smem, size = 0x4, offset = 0x4, fixed_abs, tag = 'smem constant byte address 0x4 - core index']
  #allocation1 [shape = 'u32[144,128]{1,0:T(1,128)}', space=vmem, size = 0x12000, scoped, tag = 'internal scratch']
  #allocation2 [shape = 'f32[256,128]{1,0:T(8,128)}', space=vmem, size = 0x20000, scoped, tag = 'scratch operand']
  %s0 = inlined_call_operand.vmem [shape: bf16[20736,256], index: 0, kind: input, shape index: {}]
  %s1 = inlined_call_operand.vmem [shape: bf16[256,128], index: 1, kind: input, shape index: {}]
  %s2 = inlined_call_operand.vmem [shape: f32[1,128], index: 2, kind: input, shape index: {}]
  %s3 = inlined_call_operand.vmem [shape: bf16[20736,128], index: 3, kind: output, shape index: {}]
  %s4 = sld [smem:[#allocation0]]
  $region53: #{matmul_bias_act.1} parent=0
    _
  %s6 = ssub.s32 1, %s4
  %s7 = scalar_select 0, %s6, %s4
  loop: start=0, step=1, limit=83
  $region2: #{matmul_bias_act.1} parent=0 // loop_pre_header
    _
  $region3: #{matmul_bias_act.1} parent=0 // loop_header
    %s9 = sphi 0, %s13
    %p10 = scmp.ge.s32.totalorder %s9, 83
    %s16 = sphi 0, %s35
    %s17 = sphi 0, %s31
    %s18 = sphi 0, %s27
    %s19 = sphi 0, %s16
    %s20 = sphi 0, %s17
    %s21 = sphi 0, %s18
    %s22 = sphi 0, %s19
    %s23 = sphi 0, %s20
    %s24 = sphi 0, %s21
    %s40 = sphi 0, %s42
    %s43 = sphi 0, %s40
    %s44 = sphi 0, %s43
    %s60 = sphi 0, %s44
    %s68 = sphi 0, %s70
    %s71 = sphi 0, %s68
    %s72 = sphi 0, %s71
    %s88 = sphi 0, %s72
    %s94 = sphi 0, %s96
    %s97 = sphi 0, %s94
    %s98 = sphi 0, %s97
    %s114 = sphi 0, %s98
    %s122 = sphi 0, %s124
    %s125 = sphi 0, %s122
    %s126 = sphi 0, %s125
    %s142 = sphi 0, %s126
  $region4: #{matmul_bias_act.1} parent=0 // loop_header_branch
    %12 = sbr.rel (%p10) target = $region8
  $region5: #{matmul_bias_act.1} parent=0 // loop_body
    %s14 = ssub.s32 %s9, 1
    %s15 = ssub.s32 %s9, 2
    %s25 = sadd.s32 1, %s18
    %p26 = scmp.ge.s32.totalorder %s25, 1
    %s27 = scalar_select %p26, 0, %s25
    %s28 = sadd.s32 1, %s17
    %s29 = scalar_select %p26, %s28, %s17
    %p30 = scmp.ge.s32.totalorder %s29, 1
    %s31 = scalar_select %p30, 0, %s29
    %s32 = sadd.s32 1, %s16
    %s33 = scalar_select %p30, %s32, %s16
    %p34 = scmp.ge.s32.totalorder %s33, 81
    %s35 = scalar_select %p34, 0, %s33
    %s36 = ssub.s32 %s16, %s35
    %s37 = ssub.s32 %s18, %s27
    %s38 = sor.u32 %s36, %s37
    %p39 = scmp.eq.s32.totalorder %s38, 0
    %s41 = sadd.s32 %s40, 1
    %s42 = scalar_select %p39, %s40, %s41
    %p45 = pneg %p39
    %p46 = scmp.eq.s32.totalorder %s9, 80
    %p47 = por %p45, %p46
    %p48 = scmp.ne.s32.totalorder %s40, %s43
    %p49 = scmp.eq.s32.totalorder %s9, 0
    %p50 = por %p48, %p49
    %p51 = scmp.ne.s32.totalorder %s40, %s43
    %p52 = scmp.eq.s32.totalorder %s14, 80
    %p53 = por %p51, %p52
    %p54 = scmp.ne.s32.totalorder %s43, %s44
    %p55 = scmp.eq.s32.totalorder %s14, 0
    %p56 = por %p54, %p55
    %p57 = scmp.ne.s32.totalorder %s43, %s44
    %p58 = scmp.eq.s32.totalorder %s15, 80
    %p59 = por %p57, %p58
    %p61 = scmp.ne.s32.totalorder %s44, %s60
    %p62 = scmp.eq.s32.totalorder %s15, 0
    %p63 = por %p61, %p62
    %s64 = ssub.s32 %s18, %s27
    %s65 = ssub.s32 %s17, %s31
    %s66 = sor.u32 %s64, %s65
    %p67 = scmp.eq.s32.totalorder %s66, 0
    %s69 = sadd.s32 %s68, 1
    %s70 = scalar_select %p67, %s68, %s69
    %p73 = pneg %p67
    %p74 = scmp.eq.s32.totalorder %s9, 80
    %p75 = por %p73, %p74
    %p76 = scmp.ne.s32.totalorder %s68, %s71
    %p77 = scmp.eq.s32.totalorder %s9, 0
    %p78 = por %p76, %p77
    %p79 = scmp.ne.s32.totalorder %s68, %s71
    %p80 = scmp.eq.s32.totalorder %s14, 80
    %p81 = por %p79, %p80
    %p82 = scmp.ne.s32.totalorder %s71, %s72
    %p83 = scmp.eq.s32.totalorder %s14, 0
    %p84 = por %p82, %p83
    %p85 = scmp.ne.s32.totalorder %s71, %s72
    %p86 = scmp.eq.s32.totalorder %s15, 80
    %p87 = por %p85, %p86
    %p89 = scmp.ne.s32.totalorder %s72, %s88
    %p90 = scmp.eq.s32.totalorder %s15, 0
    %p91 = por %p89, %p90
    %s92 = ssub.s32 %s17, %s31
    %p93 = scmp.eq.s32.totalorder %s92, 0
    %s95 = sadd.s32 %s94, 1
    %s96 = scalar_select %p93, %s94, %s95
    %p99 = pneg %p93
    %p100 = scmp.eq.s32.totalorder %s9, 80
    %p101 = por %p99, %p100
    %p102 = scmp.ne.s32.totalorder %s94, %s97
    %p103 = scmp.eq.s32.totalorder %s9, 0
    %p104 = por %p102, %p103
    %p105 = scmp.ne.s32.totalorder %s94, %s97
    %p106 = scmp.eq.s32.totalorder %s14, 80
    %p107 = por %p105, %p106
    %p108 = scmp.ne.s32.totalorder %s97, %s98
    %p109 = scmp.eq.s32.totalorder %s14, 0
    %p110 = por %p108, %p109
    %p111 = scmp.ne.s32.totalorder %s97, %s98
    %p112 = scmp.eq.s32.totalorder %s15, 80
    %p113 = por %p111, %p112
    %p115 = scmp.ne.s32.totalorder %s98, %s114
    %p116 = scmp.eq.s32.totalorder %s15, 0
    %p117 = por %p115, %p116
    %s118 = ssub.s32 %s16, %s35
    %s119 = ssub.s32 %s17, %s31
    %s120 = sor.u32 %s118, %s119
    %p121 = scmp.eq.s32.totalorder %s120, 0
    %s123 = sadd.s32 %s122, 1
    %s124 = scalar_select %p121, %s122, %s123
    %p127 = pneg %p121
    %p128 = scmp.eq.s32.totalorder %s9, 80
    %p129 = por %p127, %p128
    %p130 = scmp.ne.s32.totalorder %s122, %s125
    %p131 = scmp.eq.s32.totalorder %s9, 0
    %p132 = por %p130, %p131
    %p133 = scmp.ne.s32.totalorder %s122, %s125
    %p134 = scmp.eq.s32.totalorder %s14, 80
    %p135 = por %p133, %p134
    %p136 = scmp.ne.s32.totalorder %s125, %s126
    %p137 = scmp.eq.s32.totalorder %s14, 0
    %p138 = por %p136, %p137
    %p139 = scmp.ne.s32.totalorder %s125, %s126
    %p140 = scmp.eq.s32.totalorder %s15, 80
    %p141 = por %p139, %p140
    %p143 = scmp.ne.s32.totalorder %s126, %s142
    %p144 = scmp.eq.s32.totalorder %s15, 0
    %p145 = por %p143, %p144
    %p146 = scmp.le.s32.totalorder 1, %s9
    %p147 = scmp.lt.s32.totalorder %s9, 82
    %p148 = pnand %p146, %p147
    %p149 = pneg %p148
    // Predicated region
    $region9: #{matmul_bias_act.1} parent=5 // pred_check
      _
    $region10: #{matmul_bias_act.1} parent=5 // pred_check_branch
      %151 = sbr.rel (%p148) target = $region12
    $region11: #{matmul_bias_act.1} parent=5 // pred_region
      %s152 = ssub.s32 %s9, 1
      // Predicated region
      $region13: #{matmul_bias_act.1} parent=11 // pred_check
        %p153 = pneg %p84
      $region14: #{matmul_bias_act.1} parent=11 // pred_check_branch
        %155 = sbr.rel (%p153) target = $region16
      $region15: #{matmul_bias_act.1} parent=11 // pred_region
        %s156 = smul.u32 32, %s21
        %p157 = scmp.lt.s32.totalorder %s156, 31
        %s158 = scalar_select %p157, %s156, 31
        %p159 = scmp.lt.s32.totalorder %s20, 0
        %s160 = scalar_select %p159, %s20, 0
        %s161 = sadd.s32 %s160, %s158
        %s162 = smul.addr %s161, 4
        %s163 = scalar_lea.vmem %s1, %s162
        %s164 = smul.u32 32, %s21
      $region16: #{matmul_bias_act.1} parent=11 // pred_fallthru
        _
      // Predicated region
      $region17: #{matmul_bias_act.1} parent=11 // pred_check
        %p165 = pneg %p110
      $region18: #{matmul_bias_act.1} parent=11 // pred_check_branch
        %167 = sbr.rel (%p165) target = $region20
      $region19: #{matmul_bias_act.1} parent=11 // pred_region
        %p168 = scmp.lt.s32.totalorder %s20, 0
        %s169 = scalar_select %p168, %s20, 0
        %s170 = scalar_lea.vmem %s2, %s169
      $region20: #{matmul_bias_act.1} parent=11 // pred_fallthru
        _
    $region12: #{matmul_bias_act.1} parent=5 // pred_fallthru
      _
    %p171 = scmp.lt.s32.totalorder %s9, 81
    // Predicated region
    $region21: #{matmul_bias_act.1} parent=5 // pred_check
      %p172 = pneg %p171
    $region22: #{matmul_bias_act.1} parent=5 // pred_check_branch
      %174 = sbr.rel (%p172) target = $region24
    $region23: #{matmul_bias_act.1} parent=5 // pred_region
      // Predicated region
      $region25: #{matmul_bias_act.1} parent=23 // pred_check
        %p175 = pneg %p50
      $region26: #{matmul_bias_act.1} parent=23 // pred_check_branch
        %177 = sbr.rel (%p175) target = $region28
      $region27: #{matmul_bias_act.1} parent=23 // pred_region
        %s178 = smul.u32 32, %s16
        %s179 = smul.u32 2, %s18
        %p180 = scmp.lt.s32.totalorder %s178, 2591
        %s181 = scalar_select %p180, %s178, 2591
        %p182 = scmp.lt.s32.totalorder %s179, 1
        %s183 = scalar_select %p182, %s179, 1
        %s184 = smul.addr %s181, 2
        %s185 = sadd.s32 %s183, %s184
        %s186 = smul.addr %s185, 4
        %s187 = scalar_lea.vmem %s0, %s186
        %s188 = smul.u32 32, %s16
        %s189 = smul.u32 2, %s18
      $region28: #{matmul_bias_act.1} parent=23 // pred_fallthru
        _
    $region24: #{matmul_bias_act.1} parent=5 // pred_fallthru
      _
    %p190 = scmp.le.s32.totalorder 1, %s9
    %p191 = scmp.lt.s32.totalorder %s9, 82
    %p192 = pnand %p190, %p191
    %p193 = pneg %p192
    // Predicated region
    $region29: #{matmul_bias_act.1} parent=5 // pred_check
      _
    $region30: #{matmul_bias_act.1} parent=5 // pred_check_branch
      %195 = sbr.rel (%p192) target = $region32
    $region31: #{matmul_bias_act.1} parent=5 // pred_region
      %s196 = ssub.s32 %s9, 1
      %s197 = smul.u32 32, %s19
      %s198 = smul.u32 2, %s21
      %p199 = scmp.lt.s32.totalorder %s197, 2591
      %s200 = scalar_select %p199, %s197, 2591
      %p201 = scmp.lt.s32.totalorder %s198, 1
      %s202 = scalar_select %p201, %s198, 1
      %s203 = smul.addr %s200, 2
      %s204 = sadd.s32 %s202, %s203
      %s205 = smul.addr %s204, 4
      %s206 = scalar_lea.vmem %s0, %s205
      %p207 = pneg %p56
      %p208 = pneg %p53
      %s209 = smul.u32 32, %s21
      %p210 = scmp.lt.s32.totalorder %s209, 31
      %s211 = scalar_select %p210, %s209, 31
      %p212 = scmp.lt.s32.totalorder %s20, 0
      %s213 = scalar_select %p212, %s20, 0
      %s214 = sadd.s32 %s213, %s211
      %s215 = smul.addr %s214, 4
      %s216 = scalar_lea.vmem %s1, %s215
      %p217 = pneg %p84
      %p218 = pneg %p81
      %p219 = scmp.lt.s32.totalorder %s20, 0
      %s220 = scalar_select %p219, %s20, 0
      %s221 = scalar_lea.vmem %s2, %s220
      %p222 = pneg %p110
      %p223 = pneg %p107
      %p224 = pneg %p138
      %p225 = pneg %p135
      %s226 = smul.u32 32, %s19
      %p227 = scmp.lt.s32.totalorder %s226, 2591
      %s228 = scalar_select %p227, %s226, 2591
      %p229 = scmp.lt.s32.totalorder %s20, 0
      %s230 = scalar_select %p229, %s20, 0
      %s231 = sadd.s32 %s230, %s228
      %s232 = smul.addr %s231, 4
      %s233 = scalar_lea.vmem %s3, %s232
      %s234 = smul.u32 32, %s19
      %s235 = smul.u32 2, %s21
      %p236 = scmp.lt.s32.totalorder %s234, 2591
      %s237 = scalar_select %p236, %s234, 2591
      %p238 = scmp.lt.s32.totalorder %s235, 1
      %s239 = scalar_select %p238, %s235, 1
      %s240 = smul.addr %s237, 2
      %s241 = sadd.s32 %s239, %s240
      %s242 = smul.addr %s241, 4
      %s243 = scalar_lea.vmem %s0, %s242
      %s244 = smul.u32 32, %s19
      %s245 = smul.u32 2, %s21
      %s246 = smul.u32 32, %s21
      %p247 = scmp.lt.s32.totalorder %s246, 31
      %s248 = scalar_select %p247, %s246, 31
      %p249 = scmp.lt.s32.totalorder %s20, 0
      %s250 = scalar_select %p249, %s20, 0
      %s251 = sadd.s32 %s250, %s248
      %s252 = smul.addr %s251, 4
      %s253 = scalar_lea.vmem %s1, %s252
      %s254 = smul.u32 32, %s21
      %p255 = scmp.lt.s32.totalorder %s20, 0
      %s256 = scalar_select %p255, %s20, 0
      %s257 = scalar_lea.vmem %s2, %s256
      %s258 = smul.u32 32, %s19
      %p259 = scmp.lt.s32.totalorder %s258, 2591
      %s260 = scalar_select %p259, %s258, 2591
      %p261 = scmp.lt.s32.totalorder %s20, 0
      %s262 = scalar_select %p261, %s20, 0
      %s263 = sadd.s32 %s262, %s260
      %s264 = smul.addr %s263, 4
      %s265 = scalar_lea.vmem %s3, %s264
      %s266 = smul.u32 32, %s19
      %p268 = scmp.eq.s32.totalorder %s21, 0
      // Predicated region
      $region33: #{matmul_bias_act.1} parent=31 // pred_check
        %p269 = pneg %p268
      $region34: #{matmul_bias_act.1} parent=31 // pred_check_branch
        %271 = sbr.rel (%p269) target = $region36
      $region35: #{matmul_bias_act.1} parent=31 // pred_region
        %272 = vst [vmem:[#allocation2] sm:$0xff] 0.0
        %273 = vst [vmem:[#allocation2 + $0x8] sm:$0xff] 0.0
        %274 = vst [vmem:[#allocation2 + $0x10] sm:$0xff] 0.0
        %275 = vst [vmem:[#allocation2 + $0x18] sm:$0xff] 0.0
        %276 = vst [vmem:[#allocation2 + $0x20] sm:$0xff] 0.0
        %277 = vst [vmem:[#allocation2 + $0x28] sm:$0xff] 0.0
        %278 = vst [vmem:[#allocation2 + $0x30] sm:$0xff] 0.0
        %279 = vst [vmem:[#allocation2 + $0x38] sm:$0xff] 0.0
        %280 = vst [vmem:[#allocation2 + $0x40] sm:$0xff] 0.0
        %281 = vst [vmem:[#allocation2 + $0x48] sm:$0xff] 0.0
        %282 = vst [vmem:[#allocation2 + $0x50] sm:$0xff] 0.0
        %283 = vst [vmem:[#allocation2 + $0x58] sm:$0xff] 0.0
        %284 = vst [vmem:[#allocation2 + $0x60] sm:$0xff] 0.0
        %285 = vst [vmem:[#allocation2 + $0x68] sm:$0xff] 0.0
        %286 = vst [vmem:[#allocation2 + $0x70] sm:$0xff] 0.0
        %287 = vst [vmem:[#allocation2 + $0x78] sm:$0xff] 0.0
        %288 = vst [vmem:[#allocation2 + $0x80] sm:$0xff] 0.0
        %289 = vst [vmem:[#allocation2 + $0x88] sm:$0xff] 0.0
        %290 = vst [vmem:[#allocation2 + $0x90] sm:$0xff] 0.0
        %291 = vst [vmem:[#allocation2 + $0x98] sm:$0xff] 0.0
        %292 = vst [vmem:[#allocation2 + $0xa0] sm:$0xff] 0.0
        %293 = vst [vmem:[#allocation2 + $0xa8] sm:$0xff] 0.0
        %294 = vst [vmem:[#allocation2 + $0xb0] sm:$0xff] 0.0
        %295 = vst [vmem:[#allocation2 + $0xb8] sm:$0xff] 0.0
        %296 = vst [vmem:[#allocation2 + $0xc0] sm:$0xff] 0.0
        %297 = vst [vmem:[#allocation2 + $0xc8] sm:$0xff] 0.0
        %298 = vst [vmem:[#allocation2 + $0xd0] sm:$0xff] 0.0
        %299 = vst [vmem:[#allocation2 + $0xd8] sm:$0xff] 0.0
        %300 = vst [vmem:[#allocation2 + $0xe0] sm:$0xff] 0.0
        %301 = vst [vmem:[#allocation2 + $0xe8] sm:$0xff] 0.0
        %302 = vst [vmem:[#allocation2 + $0xf0] sm:$0xff] 0.0
        %303 = vst [vmem:[#allocation2 + $0xf8] sm:$0xff] 0.0
      $region36: #{matmul_bias_act.1} parent=31 // pred_fallthru
        _
      %v304 = vld [vmem:[#allocation2] sm:$0xff]
      %v305 = vld [vmem:[#allocation2 + $0x8] sm:$0xff]
      %v306 = vld [vmem:[#allocation2 + $0x10] sm:$0xff]
      %v307 = vld [vmem:[#allocation2 + $0x18] sm:$0xff]
      %v308 = vld [vmem:[#allocation2 + $0x20] sm:$0xff]
      %v309 = vld [vmem:[#allocation2 + $0x28] sm:$0xff]
      %v310 = vld [vmem:[#allocation2 + $0x30] sm:$0xff]
      %v311 = vld [vmem:[#allocation2 + $0x38] sm:$0xff]
      %v312 = vld [vmem:[#allocation2 + $0x40] sm:$0xff]
      %v313 = vld [vmem:[#allocation2 + $0x48] sm:$0xff]
      %v314 = vld [vmem:[#allocation2 + $0x50] sm:$0xff]
      %v315 = vld [vmem:[#allocation2 + $0x58] sm:$0xff]
      %v316 = vld [vmem:[#allocation2 + $0x60] sm:$0xff]
      %v317 = vld [vmem:[#allocation2 + $0x68] sm:$0xff]
      %v318 = vld [vmem:[#allocation2 + $0x70] sm:$0xff]
      %v319 = vld [vmem:[#allocation2 + $0x78] sm:$0xff]
      %v320 = vld [vmem:[#allocation2 + $0x80] sm:$0xff]
      %v321 = vld [vmem:[#allocation2 + $0x88] sm:$0xff]
      %v322 = vld [vmem:[#allocation2 + $0x90] sm:$0xff]
      %v323 = vld [vmem:[#allocation2 + $0x98] sm:$0xff]
      %v324 = vld [vmem:[#allocation2 + $0xa0] sm:$0xff]
      %v325 = vld [vmem:[#allocation2 + $0xa8] sm:$0xff]
      %v326 = vld [vmem:[#allocation2 + $0xb0] sm:$0xff]
      %v327 = vld [vmem:[#allocation2 + $0xb8] sm:$0xff]
      %v328 = vld [vmem:[#allocation2 + $0xc0] sm:$0xff]
      %v329 = vld [vmem:[#allocation2 + $0xc8] sm:$0xff]
      %v330 = vld [vmem:[#allocation2 + $0xd0] sm:$0xff]
      %v331 = vld [vmem:[#allocation2 + $0xd8] sm:$0xff]
      %v332 = vld [vmem:[#allocation2 + $0xe0] sm:$0xff]
      %v333 = vld [vmem:[#allocation2 + $0xe8] sm:$0xff]
      %v334 = vld [vmem:[#allocation2 + $0xf0] sm:$0xff]
      %v335 = vld [vmem:[#allocation2 + $0xf8] sm:$0xff]
      %v336 = vld [vmem:[%s243] sm:$0xff]
      %v337 = vld [vmem:[%s243 + $0x8] sm:$0xff]
      %v338 = vld [vmem:[%s243 + $0x10] sm:$0xff]
      %v339 = vld [vmem:[%s243 + $0x18] sm:$0xff]
      %v340 = vld [vmem:[%s243 + $0x20] sm:$0xff]
      %v341 = vld [vmem:[%s243 + $0x28] sm:$0xff]
      %v342 = vld [vmem:[%s243 + $0x30] sm:$0xff]
      %v343 = vld [vmem:[%s243 + $0x38] sm:$0xff]
      %v344 = vld [vmem:[%s243 + $0x40] sm:$0xff]
      %v345 = vld [vmem:[%s243 + $0x48] sm:$0xff]
      %v346 = vld [vmem:[%s243 + $0x50] sm:$0xff]
      %v347 = vld [vmem:[%s243 + $0x58] sm:$0xff]
      %v348 = vld [vmem:[%s243 + $0x60] sm:$0xff]
      %v349 = vld [vmem:[%s243 + $0x68] sm:$0xff]
      %v350 = vld [vmem:[%s243 + $0x70] sm:$0xff]
      %v351 = vld [vmem:[%s243 + $0x78] sm:$0xff]
      %v352 = vld [vmem:[%s243 + $0x80] sm:$0xff]
      %v353 = vld [vmem:[%s243 + $0x88] sm:$0xff]
      %v354 = vld [vmem:[%s243 + $0x90] sm:$0xff]
      %v355 = vld [vmem:[%s243 + $0x98] sm:$0xff]
      %v356 = vld [vmem:[%s243 + $0xa0] sm:$0xff]
      %v357 = vld [vmem:[%s243 + $0xa8] sm:$0xff]
      %v358 = vld [vmem:[%s243 + $0xb0] sm:$0xff]
      %v359 = vld [vmem:[%s243 + $0xb8] sm:$0xff]
      %v360 = vld [vmem:[%s243 + $0xc0] sm:$0xff]
      %v361 = vld [vmem:[%s243 + $0xc8] sm:$0xff]
      %v362 = vld [vmem:[%s243 + $0xd0] sm:$0xff]
      %v363 = vld [vmem:[%s243 + $0xd8] sm:$0xff]
      %v364 = vld [vmem:[%s243 + $0xe0] sm:$0xff]
      %v365 = vld [vmem:[%s243 + $0xe8] sm:$0xff]
      %v366 = vld [vmem:[%s243 + $0xf0] sm:$0xff]
      %v367 = vld [vmem:[%s243 + $0xf8] sm:$0xff]
      %v368 = vld [vmem:[%s253] sm:$0xf]
      %v369 = vld [vmem:[%s253 + $0x4] sm:$0xf]
      %v370 = vld [vmem:[%s253 + $0x8] sm:$0xf]
      %v371 = vld [vmem:[%s253 + $0xc] sm:$0xf]
      %v372 = vld [vmem:[%s253 + $0x10] sm:$0xf]
      %v373 = vld [vmem:[%s253 + $0x14] sm:$0xf]
      %v374 = vld [vmem:[%s253 + $0x18] sm:$0xf]
      %v375 = vld [vmem:[%s253 + $0x1c] sm:$0xf]
      %v376 = vld [vmem:[%s253 + $0x20] sm:$0xf]
      %v377 = vld [vmem:[%s253 + $0x24] sm:$0xf]
      %v378 = vld [vmem:[%s253 + $0x28] sm:$0xf]
      %v379 = vld [vmem:[%s253 + $0x2c] sm:$0xf]
      %v380 = vld [vmem:[%s253 + $0x30] sm:$0xf]
      %v381 = vld [vmem:[%s253 + $0x34] sm:$0xf]
      %v382 = vld [vmem:[%s253 + $0x38] sm:$0xf]
      %v383 = vld [vmem:[%s253 + $0x3c] sm:$0xf]
      %v384 = vld [vmem:[%s253 + $0x40] sm:$0xf]
      %v385 = vld [vmem:[%s253 + $0x44] sm:$0xf]
      %v386 = vld [vmem:[%s253 + $0x48] sm:$0xf]
      %v387 = vld [vmem:[%s253 + $0x4c] sm:$0xf]
      %v388 = vld [vmem:[%s253 + $0x50] sm:$0xf]
      %v389 = vld [vmem:[%s253 + $0x54] sm:$0xf]
      %v390 = vld [vmem:[%s253 + $0x58] sm:$0xf]
      %v391 = vld [vmem:[%s253 + $0x5c] sm:$0xf]
      %v392 = vld [vmem:[%s253 + $0x60] sm:$0xf]
      %v393 = vld [vmem:[%s253 + $0x64] sm:$0xf]
      %v394 = vld [vmem:[%s253 + $0x68] sm:$0xf]
      %v395 = vld [vmem:[%s253 + $0x6c] sm:$0xf]
      %v396 = vld [vmem:[%s253 + $0x70] sm:$0xf]
      %v397 = vld [vmem:[%s253 + $0x74] sm:$0xf]
      %v398 = vld [vmem:[%s253 + $0x78] sm:$0xf]
      %v399 = vld [vmem:[%s253 + $0x7c] sm:$0xf]
      %v432 = vunpack.c.l.b16 %v336
      %v433 = vunpack.c.h.b16 %v336
      %v434 = vunpack.c.l.b16 %v337
      %v435 = vunpack.c.h.b16 %v337
      %v436 = vunpack.c.l.b16 %v338
      %v437 = vunpack.c.h.b16 %v338
      %v438 = vunpack.c.l.b16 %v339
      %v439 = vunpack.c.h.b16 %v339
      %v440 = vunpack.c.l.b16 %v340
      %v441 = vunpack.c.h.b16 %v340
      %v442 = vunpack.c.l.b16 %v341
      %v443 = vunpack.c.h.b16 %v341
      %v444 = vunpack.c.l.b16 %v342
      %v445 = vunpack.c.h.b16 %v342
      %v446 = vunpack.c.l.b16 %v343
      %v447 = vunpack.c.h.b16 %v343
      %v448 = vunpack.c.l.b16 %v344
      %v449 = vunpack.c.h.b16 %v344
      %v450 = vunpack.c.l.b16 %v345
      %v451 = vunpack.c.h.b16 %v345
      %v452 = vunpack.c.l.b16 %v346
      %v453 = vunpack.c.h.b16 %v346
      %v454 = vunpack.c.l.b16 %v347
      %v455 = vunpack.c.h.b16 %v347
      %v456 = vunpack.c.l.b16 %v348
      %v457 = vunpack.c.h.b16 %v348
      %v458 = vunpack.c.l.b16 %v349
      %v459 = vunpack.c.h.b16 %v349
      %v460 = vunpack.c.l.b16 %v350
      %v461 = vunpack.c.h.b16 %v350
      %v462 = vunpack.c.l.b16 %v351
      %v463 = vunpack.c.h.b16 %v351
      %v464 = vunpack.c.l.b16 %v352
      %v465 = vunpack.c.h.b16 %v352
      %v466 = vunpack.c.l.b16 %v353
      %v467 = vunpack.c.h.b16 %v353
      %v468 = vunpack.c.l.b16 %v354
      %v469 = vunpack.c.h.b16 %v354
      %v470 = vunpack.c.l.b16 %v355
      %v471 = vunpack.c.h.b16 %v355
      %v472 = vunpack.c.l.b16 %v356
      %v473 = vunpack.c.h.b16 %v356
      %v474 = vunpack.c.l.b16 %v357
      %v475 = vunpack.c.h.b16 %v357
      %v476 = vunpack.c.l.b16 %v358
      %v477 = vunpack.c.h.b16 %v358
      %v478 = vunpack.c.l.b16 %v359
      %v479 = vunpack.c.h.b16 %v359
      %v480 = vunpack.c.l.b16 %v360
      %v481 = vunpack.c.h.b16 %v360
      %v482 = vunpack.c.l.b16 %v361
      %v483 = vunpack.c.h.b16 %v361
      %v484 = vunpack.c.l.b16 %v362
      %v485 = vunpack.c.h.b16 %v362
      %v486 = vunpack.c.l.b16 %v363
      %v487 = vunpack.c.h.b16 %v363
      %v488 = vunpack.c.l.b16 %v364
      %v489 = vunpack.c.h.b16 %v364
      %v490 = vunpack.c.l.b16 %v365
      %v491 = vunpack.c.h.b16 %v365
      %v492 = vunpack.c.l.b16 %v366
      %v493 = vunpack.c.h.b16 %v366
      %v494 = vunpack.c.l.b16 %v367
      %v495 = vunpack.c.h.b16 %v367
      %v496 = vpack.c.b16 %v434, %v432
      %v497 = vpack.c.b16 %v435, %v433
      %v498 = vpack.c.b16 %v438, %v436
      %v499 = vpack.c.b16 %v439, %v437
      %v500 = vpack.c.b16 %v442, %v440
      %v501 = vpack.c.b16 %v443, %v441
      %v502 = vpack.c.b16 %v446, %v444
      %v503 = vpack.c.b16 %v447, %v445
      %v504 = vpack.c.b16 %v450, %v448
      %v505 = vpack.c.b16 %v451, %v449
      %v506 = vpack.c.b16 %v454, %v452
      %v507 = vpack.c.b16 %v455, %v453
      %v508 = vpack.c.b16 %v458, %v456
      %v509 = vpack.c.b16 %v459, %v457
      %v510 = vpack.c.b16 %v462, %v460
      %v511 = vpack.c.b16 %v463, %v461
      %v512 = vpack.c.b16 %v466, %v464
      %v513 = vpack.c.b16 %v467, %v465
      %v514 = vpack.c.b16 %v470, %v468
      %v515 = vpack.c.b16 %v471, %v469
      %v516 = vpack.c.b16 %v474, %v472
      %v517 = vpack.c.b16 %v475, %v473
      %v518 = vpack.c.b16 %v478, %v476
      %v519 = vpack.c.b16 %v479, %v477
      %v520 = vpack.c.b16 %v482, %v480
      %v521 = vpack.c.b16 %v483, %v481
      %v522 = vpack.c.b16 %v486, %v484
      %v523 = vpack.c.b16 %v487, %v485
      %v524 = vpack.c.b16 %v490, %v488
      %v525 = vpack.c.b16 %v491, %v489
      %v526 = vpack.c.b16 %v494, %v492
      %v527 = vpack.c.b16 %v495, %v493
      %v592 = vunpack.c.l.b16 %v368
      %v593 = vunpack.c.l.b16 %v369
      %v594 = vunpack.c.l.b16 %v370
      %v595 = vunpack.c.l.b16 %v371
      %v596 = vunpack.c.l.b16 %v372
      %v597 = vunpack.c.l.b16 %v373
      %v598 = vunpack.c.l.b16 %v374
      %v599 = vunpack.c.l.b16 %v375
      %v600 = vunpack.c.l.b16 %v376
      %v601 = vunpack.c.l.b16 %v377
      %v602 = vunpack.c.l.b16 %v378
      %v603 = vunpack.c.l.b16 %v379
      %v604 = vunpack.c.l.b16 %v380
      %v605 = vunpack.c.l.b16 %v381
      %v606 = vunpack.c.l.b16 %v382
      %v607 = vunpack.c.l.b16 %v383
      %v608 = vunpack.c.l.b16 %v384
      %v609 = vunpack.c.l.b16 %v385
      %v610 = vunpack.c.l.b16 %v386
      %v611 = vunpack.c.l.b16 %v387
      %v612 = vunpack.c.l.b16 %v388
      %v613 = vunpack.c.l.b16 %v389
      %v614 = vunpack.c.l.b16 %v390
      %v615 = vunpack.c.l.b16 %v391
      %v616 = vunpack.c.l.b16 %v392
      %v617 = vunpack.c.l.b16 %v393
      %v618 = vunpack.c.l.b16 %v394
      %v619 = vunpack.c.l.b16 %v395
      %v620 = vunpack.c.l.b16 %v396
      %v621 = vunpack.c.l.b16 %v397
      %v622 = vunpack.c.l.b16 %v398
      %v623 = vunpack.c.l.b16 %v399
      %v624 = vpack.c.b16 %v593, %v592
      %v625 = vpack.c.b16 %v595, %v594
      %v626 = vpack.c.b16 %v597, %v596
      %v627 = vpack.c.b16 %v599, %v598
      %v628 = vpack.c.b16 %v601, %v600
      %v629 = vpack.c.b16 %v603, %v602
      %v630 = vpack.c.b16 %v605, %v604
      %v631 = vpack.c.b16 %v607, %v606
      %v632 = vpack.c.b16 %v609, %v608
      %v633 = vpack.c.b16 %v611, %v610
      %v634 = vpack.c.b16 %v613, %v612
      %v635 = vpack.c.b16 %v615, %v614
      %v636 = vpack.c.b16 %v617, %v616
      %v637 = vpack.c.b16 %v619, %v618
      %v638 = vpack.c.b16 %v621, %v620
      %v639 = vpack.c.b16 %v623, %v622
      %656 = vmatprep.subr.bf16.mxu0 0
      %657 = vmatpush1.bf16.msra.mxu0 %v624
      %658 = vmatprep.subr.bf16.mxu0 0
      %659 = vmatpush1.bf16.msra.mxu0 %v625
      %660 = vmatprep.subr.bf16.mxu0 0
      %661 = vmatpush1.bf16.msra.mxu0 %v626
      %662 = vmatprep.subr.bf16.mxu0 0
      %663 = vmatpush1.bf16.msra.mxu0 %v627
      %664 = vmatprep.subr.bf16.mxu0 0
      %665 = vmatpush1.bf16.msra.mxu0 %v628
      %666 = vmatprep.subr.bf16.mxu0 0
      %667 = vmatpush1.bf16.msra.mxu0 %v629
      %668 = vmatprep.subr.bf16.mxu0 0
      %669 = vmatpush1.bf16.msra.mxu0 %v630
      %670 = vmatprep.subr.bf16.mxu0 0
      %671 = vmatpush1.bf16.msra.mxu0 %v631
      %672 = vmatprep.subr.bf16.mxu0 0
      %673 = vmatpush1.bf16.msra.mxu0 %v632
      %674 = vmatprep.subr.bf16.mxu0 0
      %675 = vmatpush1.bf16.msra.mxu0 %v633
      %676 = vmatprep.subr.bf16.mxu0 0
      %677 = vmatpush1.bf16.msra.mxu0 %v634
      %678 = vmatprep.subr.bf16.mxu0 0
      %679 = vmatpush1.bf16.msra.mxu0 %v635
      %680 = vmatprep.subr.bf16.mxu0 0
      %681 = vmatpush1.bf16.msra.mxu0 %v636
      %682 = vmatprep.subr.bf16.mxu0 0
      %683 = vmatpush1.bf16.msra.mxu0 %v637
      %684 = vmatprep.subr.bf16.mxu0 0
      %685 = vmatpush1.bf16.msra.mxu0 %v638
      %686 = vmatprep.subr.bf16.mxu0 0
      %687 = vmatpush1.bf16.msra.mxu0 %v639
      %688 = vmatprep.mubr.bf16.mxu0 %v497
      %689 = vmatmul.mubr.bf16.gmra.mrb[0].mxu0 %v496
      %v690 = vpop.f32.mrb[0].mxu0
      %v691 = vadd.f32 0.0, %v690
      %v692 = vpop.f32.mrb[0].mxu0
      %v693 = vpop.f32.mrb[0].mxu0
      %v694 = vadd.f32 0.0, %v693
      %v695 = vpop.f32.mrb[0].mxu0
      %696 = vmatprep.mubr.bf16.mxu0 %v499
      %697 = vmatmul.mubr.bf16.gmra.mrb[0].mxu0 %v498
      %v698 = vpop.f32.mrb[0].mxu0
      %v699 = vadd.f32 0.0, %v698
      %v700 = vpop.f32.mrb[0].mxu0
      %v701 = vpop.f32.mrb[0].mxu0
      %v702 = vadd.f32 0.0, %v701
      %v703 = vpop.f32.mrb[0].mxu0
      %704 = vmatprep.mubr.bf16.mxu0 %v501
      %705 = vmatmul.mubr.bf16.gmra.mrb[0].mxu0 %v500
      %v706 = vpop.f32.mrb[0].mxu0
      %v707 = vadd.f32 0.0, %v706
      %v708 = vpop.f32.mrb[0].mxu0
      %v709 = vpop.f32.mrb[0].mxu0
      %v710 = vadd.f32 0.0, %v709
      %v711 = vpop.f32.mrb[0].mxu0
      %712 = vmatprep.mubr.bf16.mxu0 %v503
      %713 = vmatmul.mubr.bf16.gmra.mrb[0].mxu0 %v502
      %v714 = vpop.f32.mrb[0].mxu0
      %v715 = vadd.f32 0.0, %v714
      %v716 = vpop.f32.mrb[0].mxu0
      %v717 = vpop.f32.mrb[0].mxu0
      %v718 = vadd.f32 0.0, %v717
      %v719 = vpop.f32.mrb[0].mxu0
      %720 = vmatprep.mubr.bf16.mxu0 %v505
      %721 = vmatmul.mubr.bf16.gmra.mrb[0].mxu0 %v504
      %v722 = vpop.f32.mrb[0].mxu0
      %v723 = vadd.f32 0.0, %v722
      %v724 = vpop.f32.mrb[0].mxu0
      %v725 = vpop.f32.mrb[0].mxu0
      %v726 = vadd.f32 0.0, %v725
      %v727 = vpop.f32.mrb[0].mxu0
      %728 = vmatprep.mubr.bf16.mxu0 %v507
      %729 = vmatmul.mubr.bf16.gmra.mrb[0].mxu0 %v506
      %v730 = vpop.f32.mrb[0].mxu0
      %v731 = vadd.f32 0.0, %v730
      %v732 = vpop.f32.mrb[0].mxu0
      %v733 = vpop.f32.mrb[0].mxu0
      %v734 = vadd.f32 0.0, %v733
      %v735 = vpop.f32.mrb[0].mxu0
      %736 = vmatprep.mubr.bf16.mxu0 %v509
      %737 = vmatmul.mubr.bf16.gmra.mrb[0].mxu0 %v508
      %v738 = vpop.f32.mrb[0].mxu0
      %v739 = vadd.f32 0.0, %v738
      %v740 = vpop.f32.mrb[0].mxu0
      %v741 = vpop.f32.mrb[0].mxu0
      %v742 = vadd.f32 0.0, %v741
      %v743 = vpop.f32.mrb[0].mxu0
      %744 = vmatprep.mubr.bf16.mxu0 %v511
      %745 = vmatmul.mubr.bf16.gmra.mrb[0].mxu0 %v510
      %v746 = vpop.f32.mrb[0].mxu0
      %v747 = vadd.f32 0.0, %v746
      %v748 = vpop.f32.mrb[0].mxu0
      %v749 = vpop.f32.mrb[0].mxu0
      %v750 = vadd.f32 0.0, %v749
      %v751 = vpop.f32.mrb[0].mxu0
      %752 = vmatprep.mubr.bf16.mxu0 %v513
      %753 = vmatmul.mubr.bf16.gmra.mrb[0].mxu0 %v512
      %v754 = vpop.f32.mrb[0].mxu0
      %v755 = vadd.f32 0.0, %v754
      %v756 = vpop.f32.mrb[0].mxu0
      %v757 = vpop.f32.mrb[0].mxu0
      %v758 = vadd.f32 0.0, %v757
      %v759 = vpop.f32.mrb[0].mxu0
      %760 = vmatprep.mubr.bf16.mxu0 %v515
      %761 = vmatmul.mubr.bf16.gmra.mrb[0].mxu0 %v514
      %v762 = vpop.f32.mrb[0].mxu0
      %v763 = vadd.f32 0.0, %v762
      %v764 = vpop.f32.mrb[0].mxu0
      %v765 = vpop.f32.mrb[0].mxu0
      %v766 = vadd.f32 0.0, %v765
      %v767 = vpop.f32.mrb[0].mxu0
      %768 = vmatprep.mubr.bf16.mxu0 %v517
      %769 = vmatmul.mubr.bf16.gmra.mrb[0].mxu0 %v516
      %v770 = vpop.f32.mrb[0].mxu0
      %v771 = vadd.f32 0.0, %v770
      %v772 = vpop.f32.mrb[0].mxu0
      %v773 = vpop.f32.mrb[0].mxu0
      %v774 = vadd.f32 0.0, %v773
      %v775 = vpop.f32.mrb[0].mxu0
      %776 = vmatprep.mubr.bf16.mxu0 %v519
      %777 = vmatmul.mubr.bf16.gmra.mrb[0].mxu0 %v518
      %v778 = vpop.f32.mrb[0].mxu0
      %v779 = vadd.f32 0.0, %v778
      %v780 = vpop.f32.mrb[0].mxu0
      %v781 = vpop.f32.mrb[0].mxu0
      %v782 = vadd.f32 0.0, %v781
      %v783 = vpop.f32.mrb[0].mxu0
      %784 = vmatprep.mubr.bf16.mxu0 %v521
      %785 = vmatmul.mubr.bf16.gmra.mrb[0].mxu0 %v520
      %v786 = vpop.f32.mrb[0].mxu0
      %v787 = vadd.f32 0.0, %v786
      %v788 = vpop.f32.mrb[0].mxu0
      %v789 = vpop.f32.mrb[0].mxu0
      %v790 = vadd.f32 0.0, %v789
      %v791 = vpop.f32.mrb[0].mxu0
      %792 = vmatprep.mubr.bf16.mxu0 %v523
      %793 = vmatmul.mubr.bf16.gmra.mrb[0].mxu0 %v522
      %v794 = vpop.f32.mrb[0].mxu0
      %v795 = vadd.f32 0.0, %v794
      %v796 = vpop.f32.mrb[0].mxu0
      %v797 = vpop.f32.mrb[0].mxu0
      %v798 = vadd.f32 0.0, %v797
      %v799 = vpop.f32.mrb[0].mxu0
      %800 = vmatprep.mubr.bf16.mxu0 %v525
      %801 = vmatmul.mubr.bf16.gmra.mrb[0].mxu0 %v524
      %v802 = vpop.f32.mrb[0].mxu0
      %v803 = vadd.f32 0.0, %v802
      %v804 = vpop.f32.mrb[0].mxu0
      %v805 = vpop.f32.mrb[0].mxu0
      %v806 = vadd.f32 0.0, %v805
      %v807 = vpop.f32.mrb[0].mxu0
      %808 = vmatprep.mubr.bf16.mxu0 %v527
      %809 = vmatmul.mubr.bf16.gmra.mrb[0].mxu0 %v526
      %v810 = vpop.f32.mrb[0].mxu0
      %v811 = vadd.f32 0.0, %v810
      %v812 = vpop.f32.mrb[0].mxu0
      %v813 = vpop.f32.mrb[0].mxu0
      %v814 = vadd.f32 0.0, %v813
      %v815 = vpop.f32.mrb[0].mxu0
      %816 = vdwg.mxu0
      %v817 = vadd.f32 %v304, %v691
      %v818 = vadd.f32 %v305, %v694
      %v819 = vadd.f32 %v306, %v699
      %v820 = vadd.f32 %v307, %v702
      %v821 = vadd.f32 %v308, %v707
      %v822 = vadd.f32 %v309, %v710
      %v823 = vadd.f32 %v310, %v715
      %v824 = vadd.f32 %v311, %v718
      %v825 = vadd.f32 %v312, %v723
      %v826 = vadd.f32 %v313, %v726
      %v827 = vadd.f32 %v314, %v731
      %v828 = vadd.f32 %v315, %v734
      %v829 = vadd.f32 %v316, %v739
      %v830 = vadd.f32 %v317, %v742
      %v831 = vadd.f32 %v318, %v747
      %v832 = vadd.f32 %v319, %v750
      %v833 = vadd.f32 %v320, %v755
      %v834 = vadd.f32 %v321, %v758
      %v835 = vadd.f32 %v322, %v763
      %v836 = vadd.f32 %v323, %v766
      %v837 = vadd.f32 %v324, %v771
      %v838 = vadd.f32 %v325, %v774
      %v839 = vadd.f32 %v326, %v779
      %v840 = vadd.f32 %v327, %v782
      %v841 = vadd.f32 %v328, %v787
      %v842 = vadd.f32 %v329, %v790
      %v843 = vadd.f32 %v330, %v795
      %v844 = vadd.f32 %v331, %v798
      %v845 = vadd.f32 %v332, %v803
      %v846 = vadd.f32 %v333, %v806
      %v847 = vadd.f32 %v334, %v811
      %v848 = vadd.f32 %v335, %v814
      %849 = vst [vmem:[#allocation2] sm:$0xff] %v817
      %850 = vst [vmem:[#allocation2 + $0x8] sm:$0xff] %v818
      %851 = vst [vmem:[#allocation2 + $0x10] sm:$0xff] %v819
      %852 = vst [vmem:[#allocation2 + $0x18] sm:$0xff] %v820
      %853 = vst [vmem:[#allocation2 + $0x20] sm:$0xff] %v821
      %854 = vst [vmem:[#allocation2 + $0x28] sm:$0xff] %v822
      %855 = vst [vmem:[#allocation2 + $0x30] sm:$0xff] %v823
      %856 = vst [vmem:[#allocation2 + $0x38] sm:$0xff] %v824
      %857 = vst [vmem:[#allocation2 + $0x40] sm:$0xff] %v825
      %858 = vst [vmem:[#allocation2 + $0x48] sm:$0xff] %v826
      %859 = vst [vmem:[#allocation2 + $0x50] sm:$0xff] %v827
      %860 = vst [vmem:[#allocation2 + $0x58] sm:$0xff] %v828
      %861 = vst [vmem:[#allocation2 + $0x60] sm:$0xff] %v829
      %862 = vst [vmem:[#allocation2 + $0x68] sm:$0xff] %v830
      %863 = vst [vmem:[#allocation2 + $0x70] sm:$0xff] %v831
      %864 = vst [vmem:[#allocation2 + $0x78] sm:$0xff] %v832
      %865 = vst [vmem:[#allocation2 + $0x80] sm:$0xff] %v833
      %866 = vst [vmem:[#allocation2 + $0x88] sm:$0xff] %v834
      %867 = vst [vmem:[#allocation2 + $0x90] sm:$0xff] %v835
      %868 = vst [vmem:[#allocation2 + $0x98] sm:$0xff] %v836
      %869 = vst [vmem:[#allocation2 + $0xa0] sm:$0xff] %v837
      %870 = vst [vmem:[#allocation2 + $0xa8] sm:$0xff] %v838
      %871 = vst [vmem:[#allocation2 + $0xb0] sm:$0xff] %v839
      %872 = vst [vmem:[#allocation2 + $0xb8] sm:$0xff] %v840
      %873 = vst [vmem:[#allocation2 + $0xc0] sm:$0xff] %v841
      %874 = vst [vmem:[#allocation2 + $0xc8] sm:$0xff] %v842
      %875 = vst [vmem:[#allocation2 + $0xd0] sm:$0xff] %v843
      %876 = vst [vmem:[#allocation2 + $0xd8] sm:$0xff] %v844
      %877 = vst [vmem:[#allocation2 + $0xe0] sm:$0xff] %v845
      %878 = vst [vmem:[#allocation2 + $0xe8] sm:$0xff] %v846
      %879 = vst [vmem:[#allocation2 + $0xf0] sm:$0xff] %v847
      %880 = vst [vmem:[#allocation2 + $0xf8] sm:$0xff] %v848
      // Predicated region
      $region37: #{matmul_bias_act.1} parent=31 // pred_check
        %p881 = pneg %p268
      $region38: #{matmul_bias_act.1} parent=31 // pred_check_branch
        %883 = sbr.rel (%p881) target = $region40
      $region39: #{matmul_bias_act.1} parent=31 // pred_region
        %v884 = vld [vmem:[#allocation2] sm:$0xff]
        %v885 = vld [vmem:[#allocation2 + $0x8] sm:$0xff]
        %v886 = vld [vmem:[#allocation2 + $0x10] sm:$0xff]
        %v887 = vld [vmem:[#allocation2 + $0x18] sm:$0xff]
        %v888 = vld [vmem:[#allocation2 + $0x20] sm:$0xff]
        %v889 = vld [vmem:[#allocation2 + $0x28] sm:$0xff]
        %v890 = vld [vmem:[#allocation2 + $0x30] sm:$0xff]
        %v891 = vld [vmem:[#allocation2 + $0x38] sm:$0xff]
        %v892 = vld [vmem:[#allocation2 + $0x40] sm:$0xff]
        %v893 = vld [vmem:[#allocation2 + $0x48] sm:$0xff]
        %v894 = vld [vmem:[#allocation2 + $0x50] sm:$0xff]
        %v895 = vld [vmem:[#allocation2 + $0x58] sm:$0xff]
        %v896 = vld [vmem:[#allocation2 + $0x60] sm:$0xff]
        %v897 = vld [vmem:[#allocation2 + $0x68] sm:$0xff]
        %v898 = vld [vmem:[#allocation2 + $0x70] sm:$0xff]
        %v899 = vld [vmem:[#allocation2 + $0x78] sm:$0xff]
        %v900 = vld [vmem:[#allocation2 + $0x80] sm:$0xff]
        %v901 = vld [vmem:[#allocation2 + $0x88] sm:$0xff]
        %v902 = vld [vmem:[#allocation2 + $0x90] sm:$0xff]
        %v903 = vld [vmem:[#allocation2 + $0x98] sm:$0xff]
        %v904 = vld [vmem:[#allocation2 + $0xa0] sm:$0xff]
        %v905 = vld [vmem:[#allocation2 + $0xa8] sm:$0xff]
        %v906 = vld [vmem:[#allocation2 + $0xb0] sm:$0xff]
        %v907 = vld [vmem:[#allocation2 + $0xb8] sm:$0xff]
        %v908 = vld [vmem:[#allocation2 + $0xc0] sm:$0xff]
        %v909 = vld [vmem:[#allocation2 + $0xc8] sm:$0xff]
        %v910 = vld [vmem:[#allocation2 + $0xd0] sm:$0xff]
        %v911 = vld [vmem:[#allocation2 + $0xd8] sm:$0xff]
        %v912 = vld [vmem:[#allocation2 + $0xe0] sm:$0xff]
        %v913 = vld [vmem:[#allocation2 + $0xe8] sm:$0xff]
        %v914 = vld [vmem:[#allocation2 + $0xf0] sm:$0xff]
        %v915 = vld [vmem:[#allocation2 + $0xf8] sm:$0xff]
        %v916 = vld [vmem:[%s257] sm:$0x1]
        %v918 = vlaneseq
        %v919 = vshrl.u32 %v918, 7
        %v920 = vsub.s32 0, %v919
        %v921 = vrot.slane %v916, %v920
        %v923 = vadd.f32 %v884, %v921
        %v924 = vadd.f32 %v885, %v921
        %v925 = vadd.f32 %v886, %v921
        %v926 = vadd.f32 %v887, %v921
        %v927 = vadd.f32 %v888, %v921
        %v928 = vadd.f32 %v889, %v921
        %v929 = vadd.f32 %v890, %v921
        %v930 = vadd.f32 %v891, %v921
        %v931 = vadd.f32 %v892, %v921
        %v932 = vadd.f32 %v893, %v921
        %v933 = vadd.f32 %v894, %v921
        %v934 = vadd.f32 %v895, %v921
        %v935 = vadd.f32 %v896, %v921
        %v936 = vadd.f32 %v897, %v921
        %v937 = vadd.f32 %v898, %v921
        %v938 = vadd.f32 %v899, %v921
        %v939 = vadd.f32 %v900, %v921
        %v940 = vadd.f32 %v901, %v921
        %v941 = vadd.f32 %v902, %v921
        %v942 = vadd.f32 %v903, %v921
        %v943 = vadd.f32 %v904, %v921
        %v944 = vadd.f32 %v905, %v921
        %v945 = vadd.f32 %v906, %v921
        %v946 = vadd.f32 %v907, %v921
        %v947 = vadd.f32 %v908, %v921
        %v948 = vadd.f32 %v909, %v921
        %v949 = vadd.f32 %v910, %v921
        %v950 = vadd.f32 %v911, %v921
        %v951 = vadd.f32 %v912, %v921
        %v952 = vadd.f32 %v913, %v921
        %v953 = vadd.f32 %v914, %v921
        %v954 = vadd.f32 %v915, %v921
        %v955 = vpack.c.bf16 %v924, %v923
        %v956 = vpack.c.bf16 %v926, %v925
        %v957 = vpack.c.bf16 %v928, %v927
        %v958 = vpack.c.bf16 %v930, %v929
        %v959 = vpack.c.bf16 %v932, %v931
        %v960 = vpack.c.bf16 %v934, %v933
        %v961 = vpack.c.bf16 %v936, %v935
        %v962 = vpack.c.bf16 %v938, %v937
        %v963 = vpack.c.bf16 %v940, %v939
        %v964 = vpack.c.bf16 %v942, %v941
        %v965 = vpack.c.bf16 %v944, %v943
        %v966 = vpack.c.bf16 %v946, %v945
        %v967 = vpack.c.bf16 %v948, %v947
        %v968 = vpack.c.bf16 %v950, %v949
        %v969 = vpack.c.bf16 %v952, %v951
        %v970 = vpack.c.bf16 %v954, %v953
        %v987 = vunpack.c.l.b16 %v955
        %v988 = vunpack.c.h.b16 %v955
        %v989 = vunpack.c.l.b16 %v956
        %v990 = vunpack.c.h.b16 %v956
        %v991 = vunpack.c.l.b16 %v957
        %v992 = vunpack.c.h.b16 %v957
        %v993 = vunpack.c.l.b16 %v958
        %v994 = vunpack.c.h.b16 %v958
        %v995 = vunpack.c.l.b16 %v959
        %v996 = vunpack.c.h.b16 %v959
        %v997 = vunpack.c.l.b16 %v960
        %v998 = vunpack.c.h.b16 %v960
        %v999 = vunpack.c.l.b16 %v961
        %v1000 = vunpack.c.h.b16 %v961
        %v1001 = vunpack.c.l.b16 %v962
        %v1002 = vunpack.c.h.b16 %v962
        %v1003 = vunpack.c.l.b16 %v963
        %v1004 = vunpack.c.h.b16 %v963
        %v1005 = vunpack.c.l.b16 %v964
        %v1006 = vunpack.c.h.b16 %v964
        %v1007 = vunpack.c.l.b16 %v965
        %v1008 = vunpack.c.h.b16 %v965
        %v1009 = vunpack.c.l.b16 %v966
        %v1010 = vunpack.c.h.b16 %v966
        %v1011 = vunpack.c.l.b16 %v967
        %v1012 = vunpack.c.h.b16 %v967
        %v1013 = vunpack.c.l.b16 %v968
        %v1014 = vunpack.c.h.b16 %v968
        %v1015 = vunpack.c.l.b16 %v969
        %v1016 = vunpack.c.h.b16 %v969
        %v1017 = vunpack.c.l.b16 %v970
        %v1018 = vunpack.c.h.b16 %v970
        %v1019 = vpack.c.b16 %v987, %v987
        %v1020 = vpack.c.b16 %v988, %v988
        %v1021 = vpack.c.b16 %v989, %v989
        %v1022 = vpack.c.b16 %v990, %v990
        %v1023 = vpack.c.b16 %v991, %v991
        %v1024 = vpack.c.b16 %v992, %v992
        %v1025 = vpack.c.b16 %v993, %v993
        %v1026 = vpack.c.b16 %v994, %v994
        %v1027 = vpack.c.b16 %v995, %v995
        %v1028 = vpack.c.b16 %v996, %v996
        %v1029 = vpack.c.b16 %v997, %v997
        %v1030 = vpack.c.b16 %v998, %v998
        %v1031 = vpack.c.b16 %v999, %v999
        %v1032 = vpack.c.b16 %v1000, %v1000
        %v1033 = vpack.c.b16 %v1001, %v1001
        %v1034 = vpack.c.b16 %v1002, %v1002
        %v1035 = vpack.c.b16 %v1003, %v1003
        %v1036 = vpack.c.b16 %v1004, %v1004
        %v1037 = vpack.c.b16 %v1005, %v1005
        %v1038 = vpack.c.b16 %v1006, %v1006
        %v1039 = vpack.c.b16 %v1007, %v1007
        %v1040 = vpack.c.b16 %v1008, %v1008
        %v1041 = vpack.c.b16 %v1009, %v1009
        %v1042 = vpack.c.b16 %v1010, %v1010
        %v1043 = vpack.c.b16 %v1011, %v1011
        %v1044 = vpack.c.b16 %v1012, %v1012
        %v1045 = vpack.c.b16 %v1013, %v1013
        %v1046 = vpack.c.b16 %v1014, %v1014
        %v1047 = vpack.c.b16 %v1015, %v1015
        %v1048 = vpack.c.b16 %v1016, %v1016
        %v1049 = vpack.c.b16 %v1017, %v1017
        %v1050 = vpack.c.b16 %v1018, %v1018
        %1083 = vst [vmem:[%s265] sm:$0xf] %v1019
        %1084 = vst [vmem:[%s265 + $0x4] sm:$0xf] %v1020
        %1085 = vst [vmem:[%s265 + $0x8] sm:$0xf] %v1021
        %1086 = vst [vmem:[%s265 + $0xc] sm:$0xf] %v1022
        %1087 = vst [vmem:[%s265 + $0x10] sm:$0xf] %v1023
        %1088 = vst [vmem:[%s265 + $0x14] sm:$0xf] %v1024
        %1089 = vst [vmem:[%s265 + $0x18] sm:$0xf] %v1025
        %1090 = vst [vmem:[%s265 + $0x1c] sm:$0xf] %v1026
        %1091 = vst [vmem:[%s265 + $0x20] sm:$0xf] %v1027
        %1092 = vst [vmem:[%s265 + $0x24] sm:$0xf] %v1028
        %1093 = vst [vmem:[%s265 + $0x28] sm:$0xf] %v1029
        %1094 = vst [vmem:[%s265 + $0x2c] sm:$0xf] %v1030
        %1095 = vst [vmem:[%s265 + $0x30] sm:$0xf] %v1031
        %1096 = vst [vmem:[%s265 + $0x34] sm:$0xf] %v1032
        %1097 = vst [vmem:[%s265 + $0x38] sm:$0xf] %v1033
        %1098 = vst [vmem:[%s265 + $0x3c] sm:$0xf] %v1034
        %1099 = vst [vmem:[%s265 + $0x40] sm:$0xf] %v1035
        %1100 = vst [vmem:[%s265 + $0x44] sm:$0xf] %v1036
        %1101 = vst [vmem:[%s265 + $0x48] sm:$0xf] %v1037
        %1102 = vst [vmem:[%s265 + $0x4c] sm:$0xf] %v1038
        %1103 = vst [vmem:[%s265 + $0x50] sm:$0xf] %v1039
        %1104 = vst [vmem:[%s265 + $0x54] sm:$0xf] %v1040
        %1105 = vst [vmem:[%s265 + $0x58] sm:$0xf] %v1041
        %1106 = vst [vmem:[%s265 + $0x5c] sm:$0xf] %v1042
        %1107 = vst [vmem:[%s265 + $0x60] sm:$0xf] %v1043
        %1108 = vst [vmem:[%s265 + $0x64] sm:$0xf] %v1044
        %1109 = vst [vmem:[%s265 + $0x68] sm:$0xf] %v1045
        %1110 = vst [vmem:[%s265 + $0x6c] sm:$0xf] %v1046
        %1111 = vst [vmem:[%s265 + $0x70] sm:$0xf] %v1047
        %1112 = vst [vmem:[%s265 + $0x74] sm:$0xf] %v1048
        %1113 = vst [vmem:[%s265 + $0x78] sm:$0xf] %v1049
        %1114 = vst [vmem:[%s265 + $0x7c] sm:$0xf] %v1050
      $region40: #{matmul_bias_act.1} parent=31 // pred_fallthru
        _
      %s1115 = smul.u32 32, %s19
      %p1116 = scmp.lt.s32.totalorder %s1115, 2591
      %s1117 = scalar_select %p1116, %s1115, 2591
      %p1118 = scmp.lt.s32.totalorder %s20, 0
      %s1119 = scalar_select %p1118, %s20, 0
      %s1120 = sadd.s32 %s1119, %s1117
      %s1121 = smul.addr %s1120, 4
      %s1122 = scalar_lea.vmem %s3, %s1121
      // Predicated region
      $region41: #{matmul_bias_act.1} parent=31 // pred_check
        %p1123 = pneg %p135
      $region42: #{matmul_bias_act.1} parent=31 // pred_check_branch
        %1125 = sbr.rel (%p1123) target = $region44
      $region43: #{matmul_bias_act.1} parent=31 // pred_region
        %s1126 = smul.u32 32, %s19
      $region44: #{matmul_bias_act.1} parent=31 // pred_fallthru
        _
    $region32: #{matmul_bias_act.1} parent=5 // pred_fallthru
      _
    %p1127 = scmp.le.s32.totalorder 2, %s9
    // Predicated region
    $region45: #{matmul_bias_act.1} parent=5 // pred_check
      %p1128 = pneg %p1127
    $region46: #{matmul_bias_act.1} parent=5 // pred_check_branch
      %1130 = sbr.rel (%p1128) target = $region48
    $region47: #{matmul_bias_act.1} parent=5 // pred_region
      %s1131 = ssub.s32 %s9, 2
      // Predicated region
      $region49: #{matmul_bias_act.1} parent=47 // pred_check
        %p1132 = pneg %p141
      $region50: #{matmul_bias_act.1} parent=47 // pred_check_branch
        %1134 = sbr.rel (%p1132) target = $region52
      $region51: #{matmul_bias_act.1} parent=47 // pred_region
        %s1135 = smul.u32 32, %s22
        %p1136 = scmp.lt.s32.totalorder %s1135, 2591
        %s1137 = scalar_select %p1136, %s1135, 2591
        %p1138 = scmp.lt.s32.totalorder %s23, 0
        %s1139 = scalar_select %p1138, %s23, 0
        %s1140 = sadd.s32 %s1139, %s1137
        %s1141 = smul.addr %s1140, 4
        %s1142 = scalar_lea.vmem %s3, %s1141
      $region52: #{matmul_bias_act.1} parent=47 // pred_fallthru
        _
    $region48: #{matmul_bias_act.1} parent=5 // pred_fallthru
      _
  $region6: #{matmul_bias_act.1} parent=0 // loop_footer
    %s13 = sadd.s32 1, %s9
  $region7: #{matmul_bias_act.1} parent=0 // loop_footer_branch
    %8 = sbr.rel target = $region3
  $region8: #{matmul_bias_act.1} parent=0 // loop_exit
    _

</llo_original>
